<compile_context>
chip_gen: v7x
topology: tpu7x:2x2x1
jax: 0.10.0
libtpu: 0.0.40
codegen_flags: <defaults>
</compile_context>

<pallas_src>
import jax
import jax.numpy as jnp
from jax.experimental import pallas as pl
from jax.experimental.pallas import tpu as pltpu


def aham_kernel(x0_ref, x1_ref, x2_ref, x3_ref, xl_ref, o_ref):
    """Per grid step:
       x0..x3 : (1, C, tT) native-layout branch tiles (x3 IS input_list[-1]).
       xl     : (1, tT, C) flat-view tile of input_list[-1] (the .view residual).
       o      : (1, tT, C) output tile (flat view of the final (B, C, T) result).
    """
    f32 = jnp.float32
    x0 = x0_ref[...]
    x1 = x1_ref[...]
    x2 = x2_ref[...]
    x3 = x3_ref[...]

    # AdaptiveAvgPool1d(1): mean over channel_frequency (sublane axis) per frame.
    m0 = jnp.mean(x0.astype(f32), axis=-2, keepdims=True)   # (1, 1, tT)
    m1 = jnp.mean(x1.astype(f32), axis=-2, keepdims=True)
    m2 = jnp.mean(x2.astype(f32), axis=-2, keepdims=True)
    m3 = jnp.mean(x3.astype(f32), axis=-2, keepdims=True)

    # Softmax over the 4 branches (numerically stable, matches torch softmax).
    mx = jnp.maximum(jnp.maximum(m0, m1), jnp.maximum(m2, m3))
    e0 = jnp.exp(m0 - mx)
    e1 = jnp.exp(m1 - mx)
    e2 = jnp.exp(m2 - mx)
    e3 = jnp.exp(m3 - mx)
    inv = pl.reciprocal(e0 + e1 + e2 + e3, approx=False)
    # Fold the normalization into the tiny (1, 1, tT) per-frame weights.
    w0 = e0 * inv
    w1 = e1 * inv
    w2 = e2 * inv
    w3 = e3 * inv

    # matmul(x_merge, y_softmax): weighted branch blend, still in (C, T) layout
    # (weights broadcast over the C sublanes).
    a_ct = (x0.astype(f32) * w0 + x1.astype(f32) * w1
            + x2.astype(f32) * w2 + x3.astype(f32) * w3)      # (1, C, tT)

    # aham is produced row-major in (T, C); transpose the blend in-VMEM (XLU).
    a_tc = jnp.transpose(a_ct, (0, 2, 1))                      # (1, tT, C)

    # Residual with the flat-reinterpreted last input
    # (== aham.view(B, C, T) + input_list[-1], expressed in the (B, T, C) view).
    o_ref[...] = (xl_ref[...].astype(f32) + a_tc).astype(o_ref.dtype)


def _pick_tile_t(T, C, itemsize):
    """Frames-tile size: a multiple of 128 (lane dim of the native blocks) that
    divides T, sized so each per-ref tile is ~<=1 MiB. With 6 refs double
    buffered that stays well inside scoped VMEM on v5e/v6e/v7x."""
    if T % 128 != 0 or T <= 512:
        return T                              # full dim (always legal)
    target_elems = (1 << 20) // max(1, itemsize)
    tT = (max(1, target_elems // max(1, C)) // 128) * 128
    tT = max(128, min(tT, T))
    while T % tT != 0:                        # keep blocks exact (no partials)
        tT -= 128
    return tT


def aham_forward(input_list, k3=None, *, tile_t=None):
    """input_list: list of 4 arrays, each (B, channel_frequency, frames)."""
    del k3  # Parameter(torch.zeros(1)) is never used in the PyTorch forward.
    assert len(input_list) == 4, "AHAM merges exactly 4 branches"
    x0, x1, x2, x_last = input_list
    B, C, T = x_last.shape
    dtype = x_last.dtype
    itemsize = jnp.dtype(dtype).itemsize

    if tile_t is None:
        tile_t = _pick_tile_t(T, C, itemsize)
    assert tile_t == T or tile_t % 128 == 0, "frame tile must be 128-aligned or full"
    n_t = pl.cdiv(T, tile_t)

    # The PyTorch code adds aham(B,T,C).view(B,C,T) to input_list[-1](B,C,T).
    # Equivalently: add in the flat (B, T, C) reinterpretation of x_last's
    # contiguous buffer (a free bitcast reshape) and bitcast the result back.
    x_last_btc = x_last.reshape(B, T, C)

    native_spec = pl.BlockSpec((1, C, tile_t), lambda b, j: (b, 0, j))
    flat_spec = pl.BlockSpec((1, tile_t, C), lambda b, j: (b, j, 0))

    # 6 refs (5 in + 1 out), double-buffered, plus headroom; capped for v7x.
    tile_bytes = C * tile_t * itemsize
    vmem_limit = int(min(max(6 * 2 * tile_bytes + (4 << 20), 16 << 20), 64 << 20))

    out_btc = pl.pallas_call(
        aham_kernel,
        out_shape=jax.ShapeDtypeStruct((B, T, C), dtype),
        grid=(B, n_t),
        in_specs=[native_spec, native_spec, native_spec, native_spec, flat_spec],
        out_specs=flat_spec,
        compiler_params=pltpu.CompilerParams(
            dimension_semantics=("parallel", "parallel"),
            vmem_limit_bytes=vmem_limit,
        ),
    )(x0, x1, x2, x_last, x_last_btc)

    # Reinterpret back to (B, C, T) — the final aham_output shape (free bitcast).
    return out_btc.reshape(B, C, T)


def aham_reference(input_list):
    """Pure-JAX transcription of the PyTorch forward, for verification."""
    x_last = input_list[-1]
    B, C, T = x_last.shape
    xs = [jnp.transpose(x, (0, 2, 1)) for x in input_list]          # (B, T, C)
    ys = [jnp.mean(x, axis=-1, keepdims=True) for x in xs]          # (B, T, 1)
    x_merge = jnp.stack(xs, axis=-1)                                # (B, T, C, 4)
    y_merge = jnp.stack(ys, axis=-2)                                # (B, T, 4, 1)
    y_softmax = jax.nn.softmax(y_merge, axis=-2)
    aham = jnp.matmul(x_merge, y_softmax)                           # (B, T, C, 1)
    aham = aham.reshape(B, C, T)                                    # .view(B, C, T)
    return x_last + aham


if __name__ == "__main__":
    key = jax.random.PRNGKey(0)
    keys = jax.random.split(key, 8)

    # Deterministic parameter init (k3 is unused in the forward pass).
    k3 = jnp.zeros((1,), dtype=jnp.float32)

    # Case 1: tiny module-consistent shape (batch, channel_frequency, frames).
    B, CF, FR = 2, 32, 8
    inputs1 = [jax.random.normal(k, (B, CF, FR), dtype=jnp.float32) for k in keys[:4]]
    out1 = jax.block_until_ready(aham_forward(list(inputs1), k3))
    ref1 = aham_reference(list(inputs1))
    assert out1.shape == (B, CF, FR)
    assert jnp.allclose(out1, ref1, atol=1e-5, rtol=1e-5), "case-1 mismatch vs reference"

    # Case 2: exercise the frames-tiled multi-step grid path (tile_t < frames).
    B2, CF2, FR2 = 2, 8, 256
    inputs2 = [jax.random.normal(k, (B2, CF2, FR2), dtype=jnp.float32) for k in keys[4:]]
    out2 = jax.block_until_ready(aham_forward(list(inputs2), k3, tile_t=128))
    ref2 = aham_reference(list(inputs2))
    assert out2.shape == (B2, CF2, FR2)
    assert jnp.allclose(out2, ref2, atol=1e-5, rtol=1e-5), "case-2 mismatch vs reference"

    print("KERNEL_OK")
</pallas_src>

<mosaic_0001>
module attributes {stable_mosaic.version = 11 : i64} {
  func.func @aham_kernel(%arg0: i32, %arg1: i32, %arg2: memref<1x32x8xf32, #tpu.memory_space<vmem>>, %arg3: memref<1x32x8xf32, #tpu.memory_space<vmem>>, %arg4: memref<1x32x8xf32, #tpu.memory_space<vmem>>, %arg5: memref<1x32x8xf32, #tpu.memory_space<vmem>>, %arg6: memref<1x8x32xf32, #tpu.memory_space<vmem>>, %arg7: memref<1x8x32xf32, #tpu.memory_space<vmem>>) attributes {dimension_semantics = [#tpu.dimension_semantics<parallel>, #tpu.dimension_semantics<parallel>], iteration_bounds = array<i64: 2, 1>, scalar_prefetch = 0 : i64, scratch_operands = 0 : i64, tpu.core_type = #tpu.core_type<tc>, window_params = [{transform_indices = @transform_0, window_bounds = array<i64: 1, 32, 8>}, {transform_indices = @transform_1, window_bounds = array<i64: 1, 32, 8>}, {transform_indices = @transform_2, window_bounds = array<i64: 1, 32, 8>}, {transform_indices = @transform_3, window_bounds = array<i64: 1, 32, 8>}, {transform_indices = @transform_4, window_bounds = array<i64: 1, 8, 32>}, {transform_indices = @transform_5, window_bounds = array<i64: 1, 8, 32>}]} {
    %c0 = arith.constant 0 : index
    %c0_0 = arith.constant 0 : index
    %c0_1 = arith.constant 0 : index
    %0 = vector.load %arg2[%c0, %c0_0, %c0_1] : memref<1x32x8xf32, #tpu.memory_space<vmem>>, vector<1x32x8xf32>
    %c0_2 = arith.constant 0 : index
    %c0_3 = arith.constant 0 : index
    %c0_4 = arith.constant 0 : index
    %1 = vector.load %arg3[%c0_2, %c0_3, %c0_4] : memref<1x32x8xf32, #tpu.memory_space<vmem>>, vector<1x32x8xf32>
    %c0_5 = arith.constant 0 : index
    %c0_6 = arith.constant 0 : index
    %c0_7 = arith.constant 0 : index
    %2 = vector.load %arg4[%c0_5, %c0_6, %c0_7] : memref<1x32x8xf32, #tpu.memory_space<vmem>>, vector<1x32x8xf32>
    %c0_8 = arith.constant 0 : index
    %c0_9 = arith.constant 0 : index
    %c0_10 = arith.constant 0 : index
    %3 = vector.load %arg5[%c0_8, %c0_9, %c0_10] : memref<1x32x8xf32, #tpu.memory_space<vmem>>, vector<1x32x8xf32>
    %cst = arith.constant dense<0.000000e+00> : vector<1x8xf32>
    %4 = vector.multi_reduction <add>, %0, %cst [1] : vector<1x32x8xf32> to vector<1x8xf32>
    %5 = vector.shape_cast %4 : vector<1x8xf32> to vector<1x1x8xf32>
    %cst_11 = arith.constant 3.200000e+01 : f32
    %6 = vector.broadcast %cst_11 : f32 to vector<1x1x8xf32>
    %7 = arith.divf %5, %6 : vector<1x1x8xf32>
    %cst_12 = arith.constant dense<0.000000e+00> : vector<1x8xf32>
    %8 = vector.multi_reduction <add>, %1, %cst_12 [1] : vector<1x32x8xf32> to vector<1x8xf32>
    %9 = vector.shape_cast %8 : vector<1x8xf32> to vector<1x1x8xf32>
    %cst_13 = arith.constant 3.200000e+01 : f32
    %10 = vector.broadcast %cst_13 : f32 to vector<1x1x8xf32>
    %11 = arith.divf %9, %10 : vector<1x1x8xf32>
    %cst_14 = arith.constant dense<0.000000e+00> : vector<1x8xf32>
    %12 = vector.multi_reduction <add>, %2, %cst_14 [1] : vector<1x32x8xf32> to vector<1x8xf32>
    %13 = vector.shape_cast %12 : vector<1x8xf32> to vector<1x1x8xf32>
    %cst_15 = arith.constant 3.200000e+01 : f32
    %14 = vector.broadcast %cst_15 : f32 to vector<1x1x8xf32>
    %15 = arith.divf %13, %14 : vector<1x1x8xf32>
    %cst_16 = arith.constant dense<0.000000e+00> : vector<1x8xf32>
    %16 = vector.multi_reduction <add>, %3, %cst_16 [1] : vector<1x32x8xf32> to vector<1x8xf32>
    %17 = vector.shape_cast %16 : vector<1x8xf32> to vector<1x1x8xf32>
    %cst_17 = arith.constant 3.200000e+01 : f32
    %18 = vector.broadcast %cst_17 : f32 to vector<1x1x8xf32>
    %19 = arith.divf %17, %18 : vector<1x1x8xf32>
    %20 = arith.maximumf %7, %11 : vector<1x1x8xf32>
    %21 = arith.maximumf %15, %19 : vector<1x1x8xf32>
    %22 = arith.maximumf %20, %21 : vector<1x1x8xf32>
    %23 = arith.subf %7, %22 : vector<1x1x8xf32>
    %24 = math.exp %23 : vector<1x1x8xf32>
    %25 = arith.subf %11, %22 : vector<1x1x8xf32>
    %26 = math.exp %25 : vector<1x1x8xf32>
    %27 = arith.subf %15, %22 : vector<1x1x8xf32>
    %28 = math.exp %27 : vector<1x1x8xf32>
    %29 = arith.subf %19, %22 : vector<1x1x8xf32>
    %30 = math.exp %29 : vector<1x1x8xf32>
    %31 = arith.addf %24, %26 : vector<1x1x8xf32>
    %32 = arith.addf %31, %28 : vector<1x1x8xf32>
    %33 = arith.addf %32, %30 : vector<1x1x8xf32>
    %34 = tpu.reciprocal %33 : vector<1x1x8xf32> -> vector<1x1x8xf32>
    %35 = arith.mulf %24, %34 : vector<1x1x8xf32>
    %36 = arith.mulf %26, %34 : vector<1x1x8xf32>
    %37 = arith.mulf %28, %34 : vector<1x1x8xf32>
    %38 = arith.mulf %30, %34 : vector<1x1x8xf32>
    %39 = vector.broadcast %35 : vector<1x1x8xf32> to vector<1x32x8xf32>
    %40 = arith.mulf %0, %39 : vector<1x32x8xf32>
    %41 = vector.broadcast %36 : vector<1x1x8xf32> to vector<1x32x8xf32>
    %42 = arith.mulf %1, %41 : vector<1x32x8xf32>
    %43 = arith.addf %40, %42 : vector<1x32x8xf32>
    %44 = vector.broadcast %37 : vector<1x1x8xf32> to vector<1x32x8xf32>
    %45 = arith.mulf %2, %44 : vector<1x32x8xf32>
    %46 = arith.addf %43, %45 : vector<1x32x8xf32>
    %47 = vector.broadcast %38 : vector<1x1x8xf32> to vector<1x32x8xf32>
    %48 = arith.mulf %3, %47 : vector<1x32x8xf32>
    %49 = arith.addf %46, %48 : vector<1x32x8xf32>
    %50 = tpu.transpose %49, [0, 2, 1] : vector<1x32x8xf32> -> vector<1x8x32xf32>
    %c0_18 = arith.constant 0 : index
    %c0_19 = arith.constant 0 : index
    %c0_20 = arith.constant 0 : index
    %51 = vector.load %arg6[%c0_18, %c0_19, %c0_20] : memref<1x8x32xf32, #tpu.memory_space<vmem>>, vector<1x8x32xf32>
    %52 = arith.addf %51, %50 : vector<1x8x32xf32>
    %c0_21 = arith.constant 0 : index
    %c0_22 = arith.constant 0 : index
    %c0_23 = arith.constant 0 : index
    %53 = vector.load %arg7[%c0_21, %c0_22, %c0_23] : memref<1x8x32xf32, #tpu.memory_space<vmem>>, vector<1x8x32xf32>
    tpu.vector_store %arg7[%c0_21, %c0_22, %c0_23], %52 {strides = array<i32>} : memref<1x8x32xf32, #tpu.memory_space<vmem>>, vector<1x8x32xf32>,
    return
  }
  func.func @transform_0(%arg0: i32, %arg1: i32) -> (i32, i32, i32) {
    %c0_i32 = arith.constant 0 : i32
    %c0_i32_0 = arith.constant 0 : i32
    return %arg0, %c0_i32, %arg1 : i32, i32, i32
  }
  func.func @transform_1(%arg0: i32, %arg1: i32) -> (i32, i32, i32) {
    %c0_i32 = arith.constant 0 : i32
    %c0_i32_0 = arith.constant 0 : i32
    return %arg0, %c0_i32, %arg1 : i32, i32, i32
  }
  func.func @transform_2(%arg0: i32, %arg1: i32) -> (i32, i32, i32) {
    %c0_i32 = arith.constant 0 : i32
    %c0_i32_0 = arith.constant 0 : i32
    return %arg0, %c0_i32, %arg1 : i32, i32, i32
  }
  func.func @transform_3(%arg0: i32, %arg1: i32) -> (i32, i32, i32) {
    %c0_i32 = arith.constant 0 : i32
    %c0_i32_0 = arith.constant 0 : i32
    return %arg0, %c0_i32, %arg1 : i32, i32, i32
  }
  func.func @transform_4(%arg0: i32, %arg1: i32) -> (i32, i32, i32) {
    %c0_i32 = arith.constant 0 : i32
    %c0_i32_0 = arith.constant 0 : i32
    return %arg0, %arg1, %c0_i32 : i32, i32, i32
  }
  func.func @transform_5(%arg0: i32, %arg1: i32) -> (i32, i32, i32) {
    %c0_i32 = arith.constant 0 : i32
    %c0_i32_0 = arith.constant 0 : i32
    return %arg0, %arg1, %c0_i32 : i32, i32, i32
  }
}

</mosaic_0001>

<llo_original>
// kernel: tpu_custom_call.1
$region0: #{tpu_custom_call.1}
  #allocation0 [shape = 'u32[]', space=smem, size = 0x4, offset = 0x4, fixed_abs, tag = 'smem constant byte address 0x4 - core index']
  #allocation1 [shape = 'u32[144,128]{1,0:T(1,128)}', space=vmem, size = 0x12000, scoped, tag = 'internal scratch']
  %s0 = inlined_call_operand.vmem [shape: f32[2,32,8], index: 0, kind: input, shape index: {}]
  %s1 = inlined_call_operand.vmem [shape: f32[2,32,8], index: 1, kind: input, shape index: {}]
  %s2 = inlined_call_operand.vmem [shape: f32[2,32,8], index: 2, kind: input, shape index: {}]
  %s3 = inlined_call_operand.vmem [shape: f32[2,32,8], index: 3, kind: input, shape index: {}]
  %s4 = inlined_call_operand.vmem [shape: f32[2,8,32], index: 4, kind: input, shape index: {}]
  %s5 = inlined_call_operand.hbm [shape: f32[2,8,32], index: 5, kind: output, shape index: {}]
  %s6 = sld [smem:[#allocation0]]
  $region53: #{tpu_custom_call.1} parent=0
    _
  %s8 = ssub.s32 1, %s6
  %s9 = scalar_select 0, %s8, %s6
  $region1: #{tpu_custom_call.1} parent=0
    #allocation2 [shape = 'u8[8192]{0}', space=vmem, size = 0x2000, scoped, tag = 'output window, operand 0']
    #allocation3 [shape = 's32[2]{0}', space=sflag, size = 0x8, scoped, tag = 'scoped memory for tpu_custom_call.1']
    %10 = vsyncpa [#allocation3], 0
    %s11 = scalar_lea.sflag [#allocation3], 1
    %12 = vsyncpa %s11, 0
    loop: start=0, step=1, limit=4
    $region2: #{tpu_custom_call.1} parent=1 // loop_pre_header
      _
    $region3: #{tpu_custom_call.1} parent=1 // loop_header
      %s14 = sphi 0, %s18
      %p15 = scmp.ge.s32.totalorder %s14, 4
      %s21 = sphi 0, %s33
      %s22 = sphi 0, %s29
      %s23 = sphi 0, %s21
      %s24 = sphi 0, %s22
      %s25 = sphi 0, %s23
      %s26 = sphi 0, %s24
      %s38 = sphi 0, %s40
      %s41 = sphi 0, %s38
      %s42 = sphi 0, %s41
      %s58 = sphi 0, %s42
      %s66 = sphi 0, %s68
      %s69 = sphi 0, %s66
      %s70 = sphi 0, %s69
      %s86 = sphi 0, %s70
      %s94 = sphi 0, %s96
      %s97 = sphi 0, %s94
      %s98 = sphi 0, %s97
      %s114 = sphi 0, %s98
      %s122 = sphi 0, %s124
      %s125 = sphi 0, %s122
      %s126 = sphi 0, %s125
      %s142 = sphi 0, %s126
      %s150 = sphi 0, %s152
      %s153 = sphi 0, %s150
      %s154 = sphi 0, %s153
      %s170 = sphi 0, %s154
      %s178 = sphi 0, %s180
      %s181 = sphi 0, %s178
      %s182 = sphi 0, %s181
      %s198 = sphi 0, %s182
    $region4: #{tpu_custom_call.1} parent=1 // loop_header_branch
      %17 = sbr.rel (%p15) target = $region8
    $region5: #{tpu_custom_call.1} parent=1 // loop_body
      %s19 = ssub.s32 %s14, 1
      %s20 = ssub.s32 %s14, 2
      %s27 = sadd.s32 1, %s22
      %p28 = scmp.ge.s32.totalorder %s27, 1
      %s29 = scalar_select %p28, 0, %s27
      %s30 = sadd.s32 1, %s21
      %s31 = scalar_select %p28, %s30, %s21
      %p32 = scmp.ge.s32.totalorder %s31, 2
      %s33 = scalar_select %p32, 0, %s31
      %s34 = ssub.s32 %s21, %s33
      %s35 = ssub.s32 %s22, %s29
      %s36 = sor.u32 %s34, %s35
      %p37 = scmp.eq.s32.totalorder %s36, 0
      %s39 = sadd.s32 %s38, 1
      %s40 = scalar_select %p37, %s38, %s39
      %p43 = pneg %p37
      %p44 = scmp.eq.s32.totalorder %s14, 1
      %p45 = por %p43, %p44
      %p46 = scmp.ne.s32.totalorder %s38, %s41
      %p47 = scmp.eq.s32.totalorder %s14, 0
      %p48 = por %p46, %p47
      %p49 = scmp.ne.s32.totalorder %s38, %s41
      %p50 = scmp.eq.s32.totalorder %s19, 1
      %p51 = por %p49, %p50
      %p52 = scmp.ne.s32.totalorder %s41, %s42
      %p53 = scmp.eq.s32.totalorder %s19, 0
      %p54 = por %p52, %p53
      %p55 = scmp.ne.s32.totalorder %s41, %s42
      %p56 = scmp.eq.s32.totalorder %s20, 1
      %p57 = por %p55, %p56
      %p59 = scmp.ne.s32.totalorder %s42, %s58
      %p60 = scmp.eq.s32.totalorder %s20, 0
      %p61 = por %p59, %p60
      %s62 = ssub.s32 %s21, %s33
      %s63 = ssub.s32 %s22, %s29
      %s64 = sor.u32 %s62, %s63
      %p65 = scmp.eq.s32.totalorder %s64, 0
      %s67 = sadd.s32 %s66, 1
      %s68 = scalar_select %p65, %s66, %s67
      %p71 = pneg %p65
      %p72 = scmp.eq.s32.totalorder %s14, 1
      %p73 = por %p71, %p72
      %p74 = scmp.ne.s32.totalorder %s66, %s69
      %p75 = scmp.eq.s32.totalorder %s14, 0
      %p76 = por %p74, %p75
      %p77 = scmp.ne.s32.totalorder %s66, %s69
      %p78 = scmp.eq.s32.totalorder %s19, 1
      %p79 = por %p77, %p78
      %p80 = scmp.ne.s32.totalorder %s69, %s70
      %p81 = scmp.eq.s32.totalorder %s19, 0
      %p82 = por %p80, %p81
      %p83 = scmp.ne.s32.totalorder %s69, %s70
      %p84 = scmp.eq.s32.totalorder %s20, 1
      %p85 = por %p83, %p84
      %p87 = scmp.ne.s32.totalorder %s70, %s86
      %p88 = scmp.eq.s32.totalorder %s20, 0
      %p89 = por %p87, %p88
      %s90 = ssub.s32 %s21, %s33
      %s91 = ssub.s32 %s22, %s29
      %s92 = sor.u32 %s90, %s91
      %p93 = scmp.eq.s32.totalorder %s92, 0
      %s95 = sadd.s32 %s94, 1
      %s96 = scalar_select %p93, %s94, %s95
      %p99 = pneg %p93
      %p100 = scmp.eq.s32.totalorder %s14, 1
      %p101 = por %p99, %p100
      %p102 = scmp.ne.s32.totalorder %s94, %s97
      %p103 = scmp.eq.s32.totalorder %s14, 0
      %p104 = por %p102, %p103
      %p105 = scmp.ne.s32.totalorder %s94, %s97
      %p106 = scmp.eq.s32.totalorder %s19, 1
      %p107 = por %p105, %p106
      %p108 = scmp.ne.s32.totalorder %s97, %s98
      %p109 = scmp.eq.s32.totalorder %s19, 0
      %p110 = por %p108, %p109
      %p111 = scmp.ne.s32.totalorder %s97, %s98
      %p112 = scmp.eq.s32.totalorder %s20, 1
      %p113 = por %p111, %p112
      %p115 = scmp.ne.s32.totalorder %s98, %s114
      %p116 = scmp.eq.s32.totalorder %s20, 0
      %p117 = por %p115, %p116
      %s118 = ssub.s32 %s21, %s33
      %s119 = ssub.s32 %s22, %s29
      %s120 = sor.u32 %s118, %s119
      %p121 = scmp.eq.s32.totalorder %s120, 0
      %s123 = sadd.s32 %s122, 1
      %s124 = scalar_select %p121, %s122, %s123
      %p127 = pneg %p121
      %p128 = scmp.eq.s32.totalorder %s14, 1
      %p129 = por %p127, %p128
      %p130 = scmp.ne.s32.totalorder %s122, %s125
      %p131 = scmp.eq.s32.totalorder %s14, 0
      %p132 = por %p130, %p131
      %p133 = scmp.ne.s32.totalorder %s122, %s125
      %p134 = scmp.eq.s32.totalorder %s19, 1
      %p135 = por %p133, %p134
      %p136 = scmp.ne.s32.totalorder %s125, %s126
      %p137 = scmp.eq.s32.totalorder %s19, 0
      %p138 = por %p136, %p137
      %p139 = scmp.ne.s32.totalorder %s125, %s126
      %p140 = scmp.eq.s32.totalorder %s20, 1
      %p141 = por %p139, %p140
      %p143 = scmp.ne.s32.totalorder %s126, %s142
      %p144 = scmp.eq.s32.totalorder %s20, 0
      %p145 = por %p143, %p144
      %s146 = ssub.s32 %s21, %s33
      %s147 = ssub.s32 %s22, %s29
      %s148 = sor.u32 %s146, %s147
      %p149 = scmp.eq.s32.totalorder %s148, 0
      %s151 = sadd.s32 %s150, 1
      %s152 = scalar_select %p149, %s150, %s151
      %p155 = pneg %p149
      %p156 = scmp.eq.s32.totalorder %s14, 1
      %p157 = por %p155, %p156
      %p158 = scmp.ne.s32.totalorder %s150, %s153
      %p159 = scmp.eq.s32.totalorder %s14, 0
      %p160 = por %p158, %p159
      %p161 = scmp.ne.s32.totalorder %s150, %s153
      %p162 = scmp.eq.s32.totalorder %s19, 1
      %p163 = por %p161, %p162
      %p164 = scmp.ne.s32.totalorder %s153, %s154
      %p165 = scmp.eq.s32.totalorder %s19, 0
      %p166 = por %p164, %p165
      %p167 = scmp.ne.s32.totalorder %s153, %s154
      %p168 = scmp.eq.s32.totalorder %s20, 1
      %p169 = por %p167, %p168
      %p171 = scmp.ne.s32.totalorder %s154, %s170
      %p172 = scmp.eq.s32.totalorder %s20, 0
      %p173 = por %p171, %p172
      %s174 = ssub.s32 %s21, %s33
      %s175 = ssub.s32 %s22, %s29
      %s176 = sor.u32 %s174, %s175
      %p177 = scmp.eq.s32.totalorder %s176, 0
      %s179 = sadd.s32 %s178, 1
      %s180 = scalar_select %p177, %s178, %s179
      %p183 = pneg %p177
      %p184 = scmp.eq.s32.totalorder %s14, 1
      %p185 = por %p183, %p184
      %p186 = scmp.ne.s32.totalorder %s178, %s181
      %p187 = scmp.eq.s32.totalorder %s14, 0
      %p188 = por %p186, %p187
      %p189 = scmp.ne.s32.totalorder %s178, %s181
      %p190 = scmp.eq.s32.totalorder %s19, 1
      %p191 = por %p189, %p190
      %p192 = scmp.ne.s32.totalorder %s181, %s182
      %p193 = scmp.eq.s32.totalorder %s19, 0
      %p194 = por %p192, %p193
      %p195 = scmp.ne.s32.totalorder %s181, %s182
      %p196 = scmp.eq.s32.totalorder %s20, 1
      %p197 = por %p195, %p196
      %p199 = scmp.ne.s32.totalorder %s182, %s198
      %p200 = scmp.eq.s32.totalorder %s20, 0
      %p201 = por %p199, %p200
      %p202 = scmp.le.s32.totalorder 1, %s14
      %p203 = scmp.lt.s32.totalorder %s14, 3
      %p204 = pnand %p202, %p203
      %p205 = pneg %p204
      // Predicated region
      $region9: #{tpu_custom_call.1} parent=5 // pred_check
        _
      $region10: #{tpu_custom_call.1} parent=5 // pred_check_branch
        %207 = sbr.rel (%p204) target = $region12
      $region11: #{tpu_custom_call.1} parent=5 // pred_region
        %s208 = ssub.s32 %s14, 1
      $region12: #{tpu_custom_call.1} parent=5 // pred_fallthru
        _
      %p209 = scmp.lt.s32.totalorder %s14, 2
      // Predicated region
      $region13: #{tpu_custom_call.1} parent=5 // pred_check
        %p210 = pneg %p209
      $region14: #{tpu_custom_call.1} parent=5 // pred_check_branch
        %212 = sbr.rel (%p210) target = $region16
      $region15: #{tpu_custom_call.1} parent=5 // pred_region
        // Predicated region
        $region17: #{tpu_custom_call.1} parent=15 // pred_check
          %p213 = pneg %p48
        $region18: #{tpu_custom_call.1} parent=15 // pred_check_branch
          %215 = sbr.rel (%p213) target = $region20
        $region19: #{tpu_custom_call.1} parent=15 // pred_region
          %p216 = scmp.lt.s32.totalorder %s21, 1
          %s217 = scalar_select %p216, %s21, 1
          %p218 = scmp.lt.s32.totalorder %s22, 0
          %s219 = scalar_select %p218, %s22, 0
          %s220 = smul.addr %s217, 4
          %s221 = sadd.s32 %s219, %s220
          %s222 = smul.addr %s221, 8
          %s223 = scalar_lea.vmem %s0, %s222
        $region20: #{tpu_custom_call.1} parent=15 // pred_fallthru
          _
        // Predicated region
        $region21: #{tpu_custom_call.1} parent=15 // pred_check
          %p224 = pneg %p76
        $region22: #{tpu_custom_call.1} parent=15 // pred_check_branch
          %226 = sbr.rel (%p224) target = $region24
        $region23: #{tpu_custom_call.1} parent=15 // pred_region
          %p227 = scmp.lt.s32.totalorder %s21, 1
          %s228 = scalar_select %p227, %s21, 1
          %p229 = scmp.lt.s32.totalorder %s22, 0
          %s230 = scalar_select %p229, %s22, 0
          %s231 = smul.addr %s228, 4
          %s232 = sadd.s32 %s230, %s231
          %s233 = smul.addr %s232, 8
          %s234 = scalar_lea.vmem %s1, %s233
        $region24: #{tpu_custom_call.1} parent=15 // pred_fallthru
          _
        // Predicated region
        $region25: #{tpu_custom_call.1} parent=15 // pred_check
          %p235 = pneg %p104
        $region26: #{tpu_custom_call.1} parent=15 // pred_check_branch
          %237 = sbr.rel (%p235) target = $region28
        $region27: #{tpu_custom_call.1} parent=15 // pred_region
          %p238 = scmp.lt.s32.totalorder %s21, 1
          %s239 = scalar_select %p238, %s21, 1
          %p240 = scmp.lt.s32.totalorder %s22, 0
          %s241 = scalar_select %p240, %s22, 0
          %s242 = smul.addr %s239, 4
          %s243 = sadd.s32 %s241, %s242
          %s244 = smul.addr %s243, 8
          %s245 = scalar_lea.vmem %s2, %s244
        $region28: #{tpu_custom_call.1} parent=15 // pred_fallthru
          _
        // Predicated region
        $region29: #{tpu_custom_call.1} parent=15 // pred_check
          %p246 = pneg %p132
        $region30: #{tpu_custom_call.1} parent=15 // pred_check_branch
          %248 = sbr.rel (%p246) target = $region32
        $region31: #{tpu_custom_call.1} parent=15 // pred_region
          %p249 = scmp.lt.s32.totalorder %s21, 1
          %s250 = scalar_select %p249, %s21, 1
          %p251 = scmp.lt.s32.totalorder %s22, 0
          %s252 = scalar_select %p251, %s22, 0
          %s253 = smul.addr %s250, 4
          %s254 = sadd.s32 %s252, %s253
          %s255 = smul.addr %s254, 8
          %s256 = scalar_lea.vmem %s3, %s255
        $region32: #{tpu_custom_call.1} parent=15 // pred_fallthru
          _
        // Predicated region
        $region33: #{tpu_custom_call.1} parent=15 // pred_check
          %p257 = pneg %p160
        $region34: #{tpu_custom_call.1} parent=15 // pred_check_branch
          %259 = sbr.rel (%p257) target = $region36
        $region35: #{tpu_custom_call.1} parent=15 // pred_region
          %p260 = scmp.lt.s32.totalorder %s21, 1
          %s261 = scalar_select %p260, %s21, 1
          %p262 = scmp.lt.s32.totalorder %s22, 0
          %s263 = scalar_select %p262, %s22, 0
          %s264 = sadd.s32 %s263, %s261
          %s265 = smul.addr %s264, 8
          %s266 = scalar_lea.vmem %s4, %s265
        $region36: #{tpu_custom_call.1} parent=15 // pred_fallthru
          _
      $region16: #{tpu_custom_call.1} parent=5 // pred_fallthru
        _
      %p267 = scmp.le.s32.totalorder 1, %s14
      %p268 = scmp.lt.s32.totalorder %s14, 3
      %p269 = pnand %p267, %p268
      %p270 = pneg %p269
      // Predicated region
      $region37: #{tpu_custom_call.1} parent=5 // pred_check
        _
      $region38: #{tpu_custom_call.1} parent=5 // pred_check_branch
        %272 = sbr.rel (%p269) target = $region40
      $region39: #{tpu_custom_call.1} parent=5 // pred_region
        %s273 = ssub.s32 %s14, 1
        %p274 = scmp.lt.s32.totalorder %s23, 1
        %s275 = scalar_select %p274, %s23, 1
        %p276 = scmp.lt.s32.totalorder %s24, 0
        %s277 = scalar_select %p276, %s24, 0
        %s278 = smul.addr %s275, 4
        %s279 = sadd.s32 %s277, %s278
        %s280 = smul.addr %s279, 8
        %s281 = scalar_lea.vmem %s0, %s280
        %p282 = pneg %p54
        %p283 = pneg %p51
        %p284 = scmp.lt.s32.totalorder %s23, 1
        %s285 = scalar_select %p284, %s23, 1
        %p286 = scmp.lt.s32.totalorder %s24, 0
        %s287 = scalar_select %p286, %s24, 0
        %s288 = smul.addr %s285, 4
        %s289 = sadd.s32 %s287, %s288
        %s290 = smul.addr %s289, 8
        %s291 = scalar_lea.vmem %s1, %s290
        %p292 = pneg %p82
        %p293 = pneg %p79
        %p294 = scmp.lt.s32.totalorder %s23, 1
        %s295 = scalar_select %p294, %s23, 1
        %p296 = scmp.lt.s32.totalorder %s24, 0
        %s297 = scalar_select %p296, %s24, 0
        %s298 = smul.addr %s295, 4
        %s299 = sadd.s32 %s297, %s298
        %s300 = smul.addr %s299, 8
        %s301 = scalar_lea.vmem %s2, %s300
        %p302 = pneg %p110
        %p303 = pneg %p107
        %p304 = scmp.lt.s32.totalorder %s23, 1
        %s305 = scalar_select %p304, %s23, 1
        %p306 = scmp.lt.s32.totalorder %s24, 0
        %s307 = scalar_select %p306, %s24, 0
        %s308 = smul.addr %s305, 4
        %s309 = sadd.s32 %s307, %s308
        %s310 = smul.addr %s309, 8
        %s311 = scalar_lea.vmem %s3, %s310
        %p312 = pneg %p138
        %p313 = pneg %p135
        %p314 = scmp.lt.s32.totalorder %s23, 1
        %s315 = scalar_select %p314, %s23, 1
        %p316 = scmp.lt.s32.totalorder %s24, 0
        %s317 = scalar_select %p316, %s24, 0
        %s318 = sadd.s32 %s317, %s315
        %s319 = smul.addr %s318, 8
        %s320 = scalar_lea.vmem %s4, %s319
        %p321 = pneg %p166
        %p322 = pneg %p163
        %p323 = pneg %p194
        %p324 = pneg %p191
        %s325 = sand.u32 %s181, 1
        %s326 = scalar_lea.sflag [#allocation3], %s325
        %s327 = sand.u32 %s181, 1
        %s328 = smul.addr %s327, 8
        %s329 = scalar_lea.vmem [#allocation2], %s328
        %p330 = scmp.lt.s32.totalorder %s23, 1
        %s331 = scalar_select %p330, %s23, 1
        %p332 = scmp.lt.s32.totalorder %s24, 0
        %s333 = scalar_select %p332, %s24, 0
        %s334 = smul.addr %s331, 4
        %s335 = sadd.s32 %s333, %s334
        %s336 = smul.addr %s335, 8
        %s337 = scalar_lea.vmem %s0, %s336
        %p338 = scmp.lt.s32.totalorder %s23, 1
        %s339 = scalar_select %p338, %s23, 1
        %p340 = scmp.lt.s32.totalorder %s24, 0
        %s341 = scalar_select %p340, %s24, 0
        %s342 = smul.addr %s339, 4
        %s343 = sadd.s32 %s341, %s342
        %s344 = smul.addr %s343, 8
        %s345 = scalar_lea.vmem %s1, %s344
        %p346 = scmp.lt.s32.totalorder %s23, 1
        %s347 = scalar_select %p346, %s23, 1
        %p348 = scmp.lt.s32.totalorder %s24, 0
        %s349 = scalar_select %p348, %s24, 0
        %s350 = smul.addr %s347, 4
        %s351 = sadd.s32 %s349, %s350
        %s352 = smul.addr %s351, 8
        %s353 = scalar_lea.vmem %s2, %s352
        %p354 = scmp.lt.s32.totalorder %s23, 1
        %s355 = scalar_select %p354, %s23, 1
        %p356 = scmp.lt.s32.totalorder %s24, 0
        %s357 = scalar_select %p356, %s24, 0
        %s358 = smul.addr %s355, 4
        %s359 = sadd.s32 %s357, %s358
        %s360 = smul.addr %s359, 8
        %s361 = scalar_lea.vmem %s3, %s360
        %p362 = scmp.lt.s32.totalorder %s23, 1
        %s363 = scalar_select %p362, %s23, 1
        %p364 = scmp.lt.s32.totalorder %s24, 0
        %s365 = scalar_select %p364, %s24, 0
        %s366 = sadd.s32 %s365, %s363
        %s367 = smul.addr %s366, 8
        %s368 = scalar_lea.vmem %s4, %s367
        %v369 = vld [vmem:[%s337] sm:$0xff]
        %v370 = vld [vmem:[%s337 + $0x8] sm:$0xff]
        %v371 = vld [vmem:[%s337 + $0x10] sm:$0xff]
        %v372 = vld [vmem:[%s337 + $0x18] sm:$0xff]
        %v373 = vld [vmem:[%s345] sm:$0xff]
        %v374 = vld [vmem:[%s345 + $0x8] sm:$0xff]
        %v375 = vld [vmem:[%s345 + $0x10] sm:$0xff]
        %v376 = vld [vmem:[%s345 + $0x18] sm:$0xff]
        %v377 = vld [vmem:[%s353] sm:$0xff]
        %v378 = vld [vmem:[%s353 + $0x8] sm:$0xff]
        %v379 = vld [vmem:[%s353 + $0x10] sm:$0xff]
        %v380 = vld [vmem:[%s353 + $0x18] sm:$0xff]
        %v381 = vld [vmem:[%s361] sm:$0xff]
        %v382 = vld [vmem:[%s361 + $0x8] sm:$0xff]
        %v383 = vld [vmem:[%s361 + $0x10] sm:$0xff]
        %v384 = vld [vmem:[%s361 + $0x18] sm:$0xff]
        %vm385 = vcmask 64512
        %v386 = vsel %vm385, %v369, 0.0
        %v387 = vsel %vm385, %v370, 0.0
        %v388 = vadd.f32 %v386, %v387
        %v389 = vsel %vm385, %v371, 0.0
        %v390 = vadd.f32 %v388, %v389
        %v391 = vsel %vm385, %v372, 0.0
        %v392 = vadd.f32 %v390, %v391
        %v393 = vrot.slane %v392, 4
        %v394 = vadd.f32 %v392, %v393
        %v395 = vrot.slane %v394, 2
        %v396 = vadd.f32 %v394, %v395
        %v397 = vrot.slane %v396, 1
        %v398 = vadd.f32 %v396, %v397
        %v399 = vrcp.pop 32.0
        %v400 = vmul.f32 %v398, %v399
        %v401 = vsel %vm385, %v373, 0.0
        %v402 = vsel %vm385, %v374, 0.0
        %v403 = vadd.f32 %v401, %v402
        %v404 = vsel %vm385, %v375, 0.0
        %v405 = vadd.f32 %v403, %v404
        %v406 = vsel %vm385, %v376, 0.0
        %v407 = vadd.f32 %v405, %v406
        %v408 = vrot.slane %v407, 4
        %v409 = vadd.f32 %v407, %v408
        %v410 = vrot.slane %v409, 2
        %v411 = vadd.f32 %v409, %v410
        %v412 = vrot.slane %v411, 1
        %v413 = vadd.f32 %v411, %v412
        %v414 = vmul.f32 %v413, %v399
        %v415 = vsel %vm385, %v377, 0.0
        %v416 = vsel %vm385, %v378, 0.0
        %v417 = vadd.f32 %v415, %v416
        %v418 = vsel %vm385, %v379, 0.0
        %v419 = vadd.f32 %v417, %v418
        %v420 = vsel %vm385, %v380, 0.0
        %v421 = vadd.f32 %v419, %v420
        %v422 = vrot.slane %v421, 4
        %v423 = vadd.f32 %v421, %v422
        %v424 = vrot.slane %v423, 2
        %v425 = vadd.f32 %v423, %v424
        %v426 = vrot.slane %v425, 1
        %v427 = vadd.f32 %v425, %v426
        %v428 = vmul.f32 %v427, %v399
        %v429 = vsel %vm385, %v381, 0.0
        %v430 = vsel %vm385, %v382, 0.0
        %v431 = vadd.f32 %v429, %v430
        %v432 = vsel %vm385, %v383, 0.0
        %v433 = vadd.f32 %v431, %v432
        %v434 = vsel %vm385, %v384, 0.0
        %v435 = vadd.f32 %v433, %v434
        %v436 = vrot.slane %v435, 4
        %v437 = vadd.f32 %v435, %v436
        %v438 = vrot.slane %v437, 2
        %v439 = vadd.f32 %v437, %v438
        %v440 = vrot.slane %v439, 1
        %v441 = vadd.f32 %v439, %v440
        %v442 = vmul.f32 %v441, %v399
        %v443 = vmax.f32 %v400, %v414
        %v444 = vmax.f32 %v428, %v442
        %v445 = vmax.f32 %v443, %v444
        %v446 = vsub.f32 %v400, %v445
        %v447 = vmul.f32 %v446, 1.442695
        %v448 = vpow.pop %v447
        %v449 = vsub.f32 %v414, %v445
        %v450 = vmul.f32 %v449, 1.442695
        %v451 = vpow.pop %v450
        %v452 = vsub.f32 %v428, %v445
        %v453 = vmul.f32 %v452, 1.442695
        %v454 = vpow.pop %v453
        %v455 = vsub.f32 %v442, %v445
        %v456 = vmul.f32 %v455, 1.442695
        %v457 = vpow.pop %v456
        %v458 = vadd.f32 %v448, %v451
        %v459 = vadd.f32 %v458, %v454
        %v460 = vadd.f32 %v459, %v457
        %v461 = vrcp.pop %v460
        %v462 = vmul.f32 %v448, %v461
        %v463 = vmul.f32 %v451, %v461
        %v464 = vmul.f32 %v454, %v461
        %v465 = vmul.f32 %v457, %v461
        %v466 = vmul.f32 %v369, %v462
        %v467 = vmul.f32 %v370, %v462
        %v468 = vmul.f32 %v371, %v462
        %v469 = vmul.f32 %v372, %v462
        %v470 = vmul.f32 %v373, %v463
        %v471 = vmul.f32 %v374, %v463
        %v472 = vmul.f32 %v375, %v463
        %v473 = vmul.f32 %v376, %v463
        %v474 = vadd.f32 %v466, %v470
        %v475 = vadd.f32 %v467, %v471
        %v476 = vadd.f32 %v468, %v472
        %v477 = vadd.f32 %v469, %v473
        %v478 = vmul.f32 %v377, %v464
        %v479 = vmul.f32 %v378, %v464
        %v480 = vmul.f32 %v379, %v464
        %v481 = vmul.f32 %v380, %v464
        %v482 = vadd.f32 %v474, %v478
        %v483 = vadd.f32 %v475, %v479
        %v484 = vadd.f32 %v476, %v480
        %v485 = vadd.f32 %v477, %v481
        %v486 = vmul.f32 %v381, %v465
        %v487 = vmul.f32 %v382, %v465
        %v488 = vmul.f32 %v383, %v465
        %v489 = vmul.f32 %v384, %v465
        %v490 = vadd.f32 %v482, %v486
        %v491 = vadd.f32 %v483, %v487
        %v492 = vadd.f32 %v484, %v488
        %v493 = vadd.f32 %v485, %v489
        %494 = vxpose.xlu0.b32.start [1/16] %v490, 128
        %495 = vxpose.xlu0.b32.cont [2/16] %v491, 128
        %496 = vxpose.xlu0.b32.cont [3/16] %v492, 128
        %497 = vxpose.xlu0.b32.cont [4/16] %v493, 128
        %498 = vxpose.xlu0.b32.cont [5/16] 0.0, 128
        %499 = vxpose.xlu0.b32.cont [6/16] 0.0, 128
        %500 = vxpose.xlu0.b32.cont [7/16] 0.0, 128
        %501 = vxpose.xlu0.b32.cont [8/16] 0.0, 128
        %502 = vxpose.xlu0.b32.cont [9/16] 0.0, 128
        %503 = vxpose.xlu0.b32.cont [10/16] 0.0, 128
        %504 = vxpose.xlu0.b32.cont [11/16] 0.0, 128
        %505 = vxpose.xlu0.b32.cont [12/16] 0.0, 128
        %506 = vxpose.xlu0.b32.cont [13/16] 0.0, 128
        %507 = vxpose.xlu0.b32.cont [14/16] 0.0, 128
        %508 = vxpose.xlu0.b32.cont [15/16] 0.0, 128
        %509 = vxpose.xlu0.b32.end [16/16] 0.0, 128
        %v510 = vpop.trf.xlu0
        %v511 = vpop.trf.xlu0
        %v512 = vpop.trf.xlu0
        %v513 = vpop.trf.xlu0
        %v514 = vpop.trf.xlu0
        %v515 = vpop.trf.xlu0
        %v516 = vpop.trf.xlu0
        %v517 = vpop.trf.xlu0
        %v518 = vpop.trf.xlu0
        %v519 = vpop.trf.xlu0
        %v520 = vpop.trf.xlu0
        %v521 = vpop.trf.xlu0
        %v522 = vpop.trf.xlu0
        %v523 = vpop.trf.xlu0
        %v524 = vpop.trf.xlu0
        %v525 = vpop.trf.xlu0
        %v526 = vld [vmem:[%s368] sm:$0xff]
        %v527 = vadd.f32 %v526, %v510
        %vm528 = vcmask 261120
        %529 = vst.msk [vmem:[%s329] sm:$0xff] %vm528, %v527
        %s530 = sand.u32 %s181, 1
        %s531 = scalar_lea.sflag [#allocation3], %s530
        %s532 = sand.u32 %s181, 1
        %s533 = smul.addr %s532, 8
        %s534 = scalar_lea.vmem [#allocation2], %s533
        // Predicated region
        $region41: #{tpu_custom_call.1} parent=39 // pred_check
          %p535 = pneg %p191
        $region42: #{tpu_custom_call.1} parent=39 // pred_check_branch
          %537 = sbr.rel (%p535) target = $region44
        $region43: #{tpu_custom_call.1} parent=39 // pred_region
          %s539 = ssub.s32 128, 128
          %540 = vsyncadd %s531, %s539
          %s541 = sadd.s32 %s24, %s23
          %s542 = smul.addr %s541, 128
          %s543 = scalar_lea.hbm %s5, %s542
          %s545 = sshll.u32 %s534, 4
          %s546 = int_to_ptr.vmem [resolvable:$true] %s545
          %548 = dma.vmem_to_hbm [thread:$0]  %s546, 128, %s543, %s531
        $region44: #{tpu_custom_call.1} parent=39 // pred_fallthru
          _
      $region40: #{tpu_custom_call.1} parent=5 // pred_fallthru
        _
      %p549 = scmp.le.s32.totalorder 2, %s14
      // Predicated region
      $region45: #{tpu_custom_call.1} parent=5 // pred_check
        %p550 = pneg %p549
      $region46: #{tpu_custom_call.1} parent=5 // pred_check_branch
        %552 = sbr.rel (%p550) target = $region48
      $region47: #{tpu_custom_call.1} parent=5 // pred_region
        %s553 = ssub.s32 %s14, 2
        // Predicated region
        $region49: #{tpu_custom_call.1} parent=47 // pred_check
          %p554 = pneg %p197
        $region50: #{tpu_custom_call.1} parent=47 // pred_check_branch
          %556 = sbr.rel (%p554) target = $region52
        $region51: #{tpu_custom_call.1} parent=47 // pred_region
          %s557 = sand.u32 %s182, 1
          %s558 = scalar_lea.sflag [#allocation3], %s557
          %s559 = sand.u32 %s182, 1
          %s560 = smul.addr %s559, 8
          %s561 = scalar_lea.vmem [#allocation2], %s560
          %562 = dma.done %s558, 128
        $region52: #{tpu_custom_call.1} parent=47 // pred_fallthru
          _
      $region48: #{tpu_custom_call.1} parent=5 // pred_fallthru
        _
    $region6: #{tpu_custom_call.1} parent=1 // loop_footer
      %s18 = sadd.s32 1, %s14
    $region7: #{tpu_custom_call.1} parent=1 // loop_footer_branch
      %13 = sbr.rel target = $region3
    $region8: #{tpu_custom_call.1} parent=1 // loop_exit
      _
    %563 = vsyncpa [#allocation3], 1
    %s564 = scalar_lea.sflag [#allocation3], 1
    %565 = vsyncpa %s564, 1

</llo_original>
